<compile_context>
chip_gen: v7x
topology: tpu7x:2x2x1
jax: 0.10.0
libtpu: 0.0.40
codegen_flags: <defaults>
</compile_context>

<pallas_src>
import jax
import jax.numpy as jnp
from jax import lax
from jax.experimental import pallas as pl
from jax.experimental.pallas import tpu as pltpu

ETA = 1e-6          # Constants.eta in the original repo

DATA_DIM = 2        # data_size = torch.Size([2])
HIDDEN_DIM = 100
LATENT_DIM = 4

H_PAD = 128                 # hidden width padded to native 128-lane / MXU-K width
OUT_DIM = 2 * LATENT_DIM    # fused [mu | sigma] head output rows (sublane dim)
LANE = 128
TN_MAX = 4096               # batch columns per grid step (lane dim of the tiles)


def _round_up(n, m):
    return ((n + m - 1) // m) * m


def _cdiv(a, b):
    return -(-a // b)


def enc_kernel(xT_ref, w1_ref, b1_ref, whT_ref, bh_ref, out_ref):
    # xT_ref: [2, tn]  (batch on lanes)
    # w1_ref: [H_PAD, 2], b1_ref: [H_PAD, 1]  (padded rows are zero)
    # whT_ref: [OUT_DIM, H_PAD], bh_ref: [OUT_DIM, 1]
    x0 = xT_ref[0:1, :]                     # [1, tn] sublane-broadcast operand
    x1 = xT_ref[1:2, :]                     # [1, tn]

    # First layer on the VPU: two broadcast FMAs (K=2 would waste the MXU).
    h = w1_ref[:, 0:1] * x0 + w1_ref[:, 1:2] * x1 + b1_ref[...]   # [H_PAD, tn]
    h = jnp.maximum(h, 0.0)                 # padded hidden rows stay exactly 0

    # Fused heads on the MXU: [8, H_PAD] @ [H_PAD, tn] -> lane-dense [8, tn].
    z = jnp.dot(whT_ref[...], h, preferred_element_type=jnp.float32) + bh_ref[...]

    # Stable softplus on every element (exp/log1p hit the EUP slot - free);
    # sublane-iota select keeps the first LATENT_DIM rows as the linear mu.
    sp = jnp.maximum(z, 0.0) + jnp.log1p(jnp.exp(-jnp.abs(z))) + ETA
    row = lax.broadcasted_iota(jnp.int32, z.shape, dimension=0)
    out_ref[...] = jnp.where(row >= LATENT_DIM, sp, z)


def prepare_params(w1, b1, w21, b21, w22, b22):
    """Pack torch-layout params for the transposed kernel. Done once per model.

    Expects torch nn.Linear layouts: weights (out_features, in_features),
    biases 1-D (out_features,) (2-D (1, out) also accepted).
    """
    b1 = jnp.asarray(b1, jnp.float32).reshape(-1)
    b21 = jnp.asarray(b21, jnp.float32).reshape(-1)
    b22 = jnp.asarray(b22, jnp.float32).reshape(-1)

    w1p = jnp.zeros((H_PAD, DATA_DIM), jnp.float32).at[:HIDDEN_DIM, :].set(w1)
    b1p = jnp.zeros((H_PAD, 1), jnp.float32).at[:HIDDEN_DIM, 0].set(b1)

    whT = jnp.zeros((OUT_DIM, H_PAD), jnp.float32)
    whT = whT.at[:LATENT_DIM, :HIDDEN_DIM].set(w21)
    whT = whT.at[LATENT_DIM:, :HIDDEN_DIM].set(w22)
    bhT = jnp.concatenate([b21, b22], axis=0).reshape(OUT_DIM, 1)
    return w1p, b1p, whT, bhT


def enc_forward(x, w1p, b1p, whT, bhT):
    """x: [..., DATA_DIM] float32. Returns (mu, sigma), each [..., LATENT_DIM]."""
    lead = x.shape[:-1]
    x2 = x.reshape(-1, x.shape[-1])                     # flatten all leading dims
    B = x2.shape[0]

    # Lane-dense tiling: batch on the 128-lane axis.  Cap the tile at roughly
    # half the padded batch so the grid keeps >=2 parallel steps (v7x: both
    # TensorCores busy); TN_MAX keeps per-step VMEM tiny everywhere.
    b_pad128 = _round_up(max(B, 1), LANE)
    tn = min(TN_MAX, max(LANE, _round_up(_cdiv(b_pad128, 2), LANE)))
    b_pad = _round_up(B, tn)
    grid = b_pad // tn

    x_t = x2.T                                          # [2, B]; one small copy
    if b_pad != B:
        # Pad the transposed copy -> fuses into the transpose, no extra pass.
        x_t = jnp.pad(x_t, ((0, 0), (0, b_pad - B)))

    out_t = pl.pallas_call(
        enc_kernel,
        out_shape=jax.ShapeDtypeStruct((OUT_DIM, b_pad), jnp.float32),
        grid_spec=pltpu.PrefetchScalarGridSpec(
            num_scalar_prefetch=0,
            grid=(grid,),
            in_specs=[
                pl.BlockSpec((DATA_DIM, tn), lambda i: (0, i)),     # x^T (tiled)
                pl.BlockSpec((H_PAD, DATA_DIM), lambda i: (0, 0)),  # W1   (resident)
                pl.BlockSpec((H_PAD, 1), lambda i: (0, 0)),         # b1   (resident)
                pl.BlockSpec((OUT_DIM, H_PAD), lambda i: (0, 0)),   # fused head W
                pl.BlockSpec((OUT_DIM, 1), lambda i: (0, 0)),       # fused head b
            ],
            out_specs=pl.BlockSpec((OUT_DIM, tn), lambda i: (0, i)),
        ),
        compiler_params=pltpu.CompilerParams(
            dimension_semantics=("parallel",),   # shard grid across 2 TCs on v7x
        ),
    )(x_t, w1p, b1p, whT, bhT)

    mu = out_t[:LATENT_DIM, :B].T.reshape(*lead, LATENT_DIM)
    sigma = out_t[LATENT_DIM:, :B].T.reshape(*lead, LATENT_DIM)
    return mu, sigma


def init_params(key):
    """Deterministic init, torch nn.Linear layouts: W (out, in), b (out,)."""
    k1, k2, k3, k4, k5, k6 = jax.random.split(key, 6)
    w1 = jax.random.normal(k1, (HIDDEN_DIM, DATA_DIM), jnp.float32) * 0.1
    b1 = jax.random.normal(k2, (HIDDEN_DIM,), jnp.float32) * 0.1
    w21 = jax.random.normal(k3, (LATENT_DIM, HIDDEN_DIM), jnp.float32) * 0.1
    b21 = jax.random.normal(k4, (LATENT_DIM,), jnp.float32) * 0.1
    w22 = jax.random.normal(k5, (LATENT_DIM, HIDDEN_DIM), jnp.float32) * 0.1
    b22 = jax.random.normal(k6, (LATENT_DIM,), jnp.float32) * 0.1
    return w1, b1, w21, b21, w22, b22


def enc_reference(x, w1, b1, w21, b21, w22, b22):
    """Pure-JAX reference (torch layouts) for correctness checking."""
    x2 = x.reshape(*x.shape[:-1], -1)
    h = jnp.maximum(x2 @ w1.T + b1, 0.0)
    mu = h @ w21.T + b21
    sig = jax.nn.softplus(h @ w22.T + b22) + ETA
    return mu, sig


if __name__ == "__main__":
    key = jax.random.PRNGKey(0)
    kx, kp = jax.random.split(key)

    # Leading dims (2, 128) -> 256 rows total: exercises leading-dim flattening
    # and a 2-step batch grid (tn = 128), so the "parallel" axis is non-trivial.
    x = jax.random.normal(kx, (2, 128, DATA_DIM), jnp.float32)

    raw_params = init_params(kp)
    packed = prepare_params(*raw_params)

    mu, sigma = enc_forward(x, *packed)
    jax.block_until_ready((mu, sigma))

    mu_ref, sigma_ref = enc_reference(x, *raw_params)
    assert mu.shape == (2, 128, LATENT_DIM) and sigma.shape == (2, 128, LATENT_DIM)
    assert jnp.allclose(mu, mu_ref, atol=1e-5, rtol=1e-5)
    assert jnp.allclose(sigma, sigma_ref, atol=1e-5, rtol=1e-5)
    assert bool(jnp.all(sigma > 0.0))

    # Also check a plain 2-D small batch (grid of 1, padded lane tail).
    x_small = jax.random.normal(jax.random.PRNGKey(1), (8, DATA_DIM), jnp.float32)
    mu_s, sig_s = enc_forward(x_small, *packed)
    jax.block_until_ready((mu_s, sig_s))
    mu_s_ref, sig_s_ref = enc_reference(x_small, *raw_params)
    assert mu_s.shape == (8, LATENT_DIM) and sig_s.shape == (8, LATENT_DIM)
    assert jnp.allclose(mu_s, mu_s_ref, atol=1e-5, rtol=1e-5)
    assert jnp.allclose(sig_s, sig_s_ref, atol=1e-5, rtol=1e-5)

    print("KERNEL_OK")
</pallas_src>

<mosaic_0001>
module attributes {stable_mosaic.version = 11 : i64} {
  func.func @enc_kernel(%arg0: i32, %arg1: memref<2x128xf32, #tpu.memory_space<vmem>>, %arg2: memref<128x2xf32, #tpu.memory_space<vmem>>, %arg3: memref<128x1xf32, #tpu.memory_space<vmem>>, %arg4: memref<8x128xf32, #tpu.memory_space<vmem>>, %arg5: memref<8x1xf32, #tpu.memory_space<vmem>>, %arg6: memref<8x128xf32, #tpu.memory_space<vmem>>) attributes {dimension_semantics = [#tpu.dimension_semantics<parallel>], iteration_bounds = array<i64: 2>, scalar_prefetch = 0 : i64, scratch_operands = 0 : i64, tpu.core_type = #tpu.core_type<tc>, window_params = [{transform_indices = @transform_0, window_bounds = array<i64: 2, 128>}, {pipeline_mode = #tpu.pipeline_mode<synchronous>, transform_indices = @transform_1, window_bounds = array<i64: 128, 2>}, {pipeline_mode = #tpu.pipeline_mode<synchronous>, transform_indices = @transform_2, window_bounds = array<i64: 128, 1>}, {pipeline_mode = #tpu.pipeline_mode<synchronous>, transform_indices = @transform_3, window_bounds = array<i64: 8, 128>}, {pipeline_mode = #tpu.pipeline_mode<synchronous>, transform_indices = @transform_4, window_bounds = array<i64: 8, 1>}, {transform_indices = @transform_5, window_bounds = array<i64: 8, 128>}]} {
    %c0 = arith.constant 0 : index
    %c0_0 = arith.constant 0 : index
    %0 = vector.load %arg1[%c0, %c0_0] : memref<2x128xf32, #tpu.memory_space<vmem>>, vector<1x128xf32>
    %c1 = arith.constant 1 : index
    %c0_1 = arith.constant 0 : index
    %1 = vector.load %arg1[%c1, %c0_1] : memref<2x128xf32, #tpu.memory_space<vmem>>, vector<1x128xf32>
    %c0_2 = arith.constant 0 : index
    %c0_3 = arith.constant 0 : index
    %2 = vector.load %arg2[%c0_2, %c0_3] : memref<128x2xf32, #tpu.memory_space<vmem>>, vector<128x1xf32>
    %3 = vector.broadcast %2 : vector<128x1xf32> to vector<128x128xf32>
    %4 = vector.broadcast %0 : vector<1x128xf32> to vector<128x128xf32>
    %5 = arith.mulf %3, %4 : vector<128x128xf32>
    %c0_4 = arith.constant 0 : index
    %c1_5 = arith.constant 1 : index
    %6 = vector.load %arg2[%c0_4, %c1_5] : memref<128x2xf32, #tpu.memory_space<vmem>>, vector<128x1xf32>
    %7 = vector.broadcast %6 : vector<128x1xf32> to vector<128x128xf32>
    %8 = vector.broadcast %1 : vector<1x128xf32> to vector<128x128xf32>
    %9 = arith.mulf %7, %8 : vector<128x128xf32>
    %10 = arith.addf %5, %9 : vector<128x128xf32>
    %c0_6 = arith.constant 0 : index
    %c0_7 = arith.constant 0 : index
    %11 = vector.load %arg3[%c0_6, %c0_7] : memref<128x1xf32, #tpu.memory_space<vmem>>, vector<128x1xf32>
    %12 = vector.broadcast %11 : vector<128x1xf32> to vector<128x128xf32>
    %13 = arith.addf %10, %12 : vector<128x128xf32>
    %cst = arith.constant 0.000000e+00 : f32
    %14 = vector.broadcast %cst : f32 to vector<128x128xf32>
    %15 = arith.maximumf %13, %14 : vector<128x128xf32>
    %c0_8 = arith.constant 0 : index
    %c0_9 = arith.constant 0 : index
    %16 = vector.load %arg4[%c0_8, %c0_9] : memref<8x128xf32, #tpu.memory_space<vmem>>, vector<8x128xf32>
    %cst_10 = arith.constant dense<0.000000e+00> : vector<8x128xf32>
    %17 = tpu.matmul %16, %15, %cst_10 {dimension_numbers = #tpu.dot_dimension_numbers<[1], [0], [0], [1], [0, 0, 1, 1], [], []>} : vector<8x128xf32>, vector<128x128xf32>, vector<8x128xf32> -> vector<8x128xf32>
    %c0_11 = arith.constant 0 : index
    %c0_12 = arith.constant 0 : index
    %18 = vector.load %arg5[%c0_11, %c0_12] : memref<8x1xf32, #tpu.memory_space<vmem>>, vector<8x1xf32>
    %19 = vector.broadcast %18 : vector<8x1xf32> to vector<8x128xf32>
    %20 = arith.addf %17, %19 : vector<8x128xf32>
    %cst_13 = arith.constant 0.000000e+00 : f32
    %21 = vector.broadcast %cst_13 : f32 to vector<8x128xf32>
    %22 = arith.maximumf %20, %21 : vector<8x128xf32>
    %23 = math.absf %20 : vector<8x128xf32>
    %cst_14 = arith.constant 0.000000e+00 : f32
    %24 = vector.broadcast %cst_14 : f32 to vector<8x128xf32>
    %25 = arith.subf %24, %23 : vector<8x128xf32>
    %26 = math.exp %25 : vector<8x128xf32>
    %27 = math.log1p %26 : vector<8x128xf32>
    %28 = arith.addf %22, %27 : vector<8x128xf32>
    %cst_15 = arith.constant 9.99999997E-7 : f32
    %29 = vector.broadcast %cst_15 : f32 to vector<8x128xf32>
    %30 = arith.addf %28, %29 : vector<8x128xf32>
    %31 = tpu.iota {dimensions = array<i32: 0>} : vector<8x128xi32>
    %c4_i32 = arith.constant 4 : i32
    %32 = vector.broadcast %c4_i32 : i32 to vector<8x128xi32>
    %33 = arith.cmpi sge, %31, %32 : vector<8x128xi32>
    %34 = arith.select %33, %30, %20 : vector<8x128xi1>, vector<8x128xf32>
    %c0_16 = arith.constant 0 : index
    %c0_17 = arith.constant 0 : index
    %35 = vector.load %arg6[%c0_16, %c0_17] : memref<8x128xf32, #tpu.memory_space<vmem>>, vector<8x128xf32>
    tpu.vector_store %arg6[%c0_16, %c0_17], %34 {strides = array<i32>} : memref<8x128xf32, #tpu.memory_space<vmem>>, vector<8x128xf32>,
    return
  }
  func.func @transform_0(%arg0: i32) -> (i32, i32) {
    %c0_i32 = arith.constant 0 : i32
    %c0_i32_0 = arith.constant 0 : i32
    return %c0_i32, %arg0 : i32, i32
  }
  func.func @transform_1(%arg0: i32) -> (i32, i32) {
    %c0_i32 = arith.constant 0 : i32
    %c0_i32_0 = arith.constant 0 : i32
    %c0_i32_1 = arith.constant 0 : i32
    return %c0_i32, %c0_i32_0 : i32, i32
  }
  func.func @transform_2(%arg0: i32) -> (i32, i32) {
    %c0_i32 = arith.constant 0 : i32
    %c0_i32_0 = arith.constant 0 : i32
    %c0_i32_1 = arith.constant 0 : i32
    return %c0_i32, %c0_i32_0 : i32, i32
  }
  func.func @transform_3(%arg0: i32) -> (i32, i32) {
    %c0_i32 = arith.constant 0 : i32
    %c0_i32_0 = arith.constant 0 : i32
    %c0_i32_1 = arith.constant 0 : i32
    return %c0_i32, %c0_i32_0 : i32, i32
  }
  func.func @transform_4(%arg0: i32) -> (i32, i32) {
    %c0_i32 = arith.constant 0 : i32
    %c0_i32_0 = arith.constant 0 : i32
    %c0_i32_1 = arith.constant 0 : i32
    return %c0_i32, %c0_i32_0 : i32, i32
  }
  func.func @transform_5(%arg0: i32) -> (i32, i32) {
    %c0_i32 = arith.constant 0 : i32
    %c0_i32_0 = arith.constant 0 : i32
    return %c0_i32, %arg0 : i32, i32
  }
}

</mosaic_0001>

<llo_original>
// kernel: tpu_custom_call.1
$region0: #{tpu_custom_call.1}
  #allocation0 [shape = 'u32[]', space=smem, size = 0x4, offset = 0x4, fixed_abs, tag = 'smem constant byte address 0x4 - core index']
  #allocation1 [shape = 'u32[144,128]{1,0:T(1,128)}', space=vmem, size = 0x12000, scoped, tag = 'internal scratch']
  %s0 = inlined_call_operand.vmem [shape: f32[2,256], index: 0, kind: input, shape index: {}]
  %s1 = inlined_call_operand.vmem [shape: f32[128,2], index: 1, kind: input, shape index: {}]
  %s2 = inlined_call_operand.vmem [shape: f32[128,1], index: 2, kind: input, shape index: {}]
  %s3 = inlined_call_operand.vmem [shape: f32[8,128], index: 3, kind: input, shape index: {}]
  %s4 = inlined_call_operand.vmem [shape: f32[8,1], index: 4, kind: input, shape index: {}]
  %s5 = inlined_call_operand.hbm [shape: f32[8,256], index: 5, kind: output, shape index: {}]
  %s6 = sld [smem:[#allocation0]]
  $region53: #{tpu_custom_call.1} parent=0
    _
  %s8 = ssub.s32 1, %s6
  %s9 = scalar_select 0, %s8, %s6
  $region1: #{tpu_custom_call.1} parent=0
    #allocation2 [shape = 'u8[8192]{0}', space=vmem, size = 0x2000, scoped, tag = 'output window, operand 0']
    #allocation3 [shape = 's32[2]{0}', space=sflag, size = 0x8, scoped, tag = 'scoped memory for tpu_custom_call.1']
    %10 = vsyncpa [#allocation3], 0
    %s11 = scalar_lea.sflag [#allocation3], 1
    %12 = vsyncpa %s11, 0
    loop: start=0, step=1, limit=4
    $region2: #{tpu_custom_call.1} parent=1 // loop_pre_header
      _
    $region3: #{tpu_custom_call.1} parent=1 // loop_header
      %s14 = sphi 0, %s18
      %p15 = scmp.ge.s32.totalorder %s14, 4
      %s24 = sphi 0, %s26
      %s27 = sphi 0, %s24
      %s28 = sphi 0, %s27
      %s44 = sphi 0, %s28
      %s48 = sphi 0, %s48
      %s50 = sphi 0, %s48
      %s51 = sphi 0, %s50
      %s65 = sphi 0, %s51
      %s69 = sphi 0, %s69
      %s71 = sphi 0, %s69
      %s72 = sphi 0, %s71
      %s86 = sphi 0, %s72
      %s90 = sphi 0, %s90
      %s92 = sphi 0, %s90
      %s93 = sphi 0, %s92
      %s107 = sphi 0, %s93
      %s111 = sphi 0, %s111
      %s113 = sphi 0, %s111
      %s114 = sphi 0, %s113
      %s128 = sphi 0, %s114
      %s134 = sphi 0, %s136
      %s137 = sphi 0, %s134
      %s138 = sphi 0, %s137
      %s154 = sphi 0, %s138
    $region4: #{tpu_custom_call.1} parent=1 // loop_header_branch
      %17 = sbr.rel (%p15) target = $region8
    $region5: #{tpu_custom_call.1} parent=1 // loop_body
      %s19 = ssub.s32 %s14, 1
      %s20 = ssub.s32 %s14, 2
      %s21 = sadd.s32 %s14, 1
      %s22 = ssub.s32 %s14, %s21
      %p23 = scmp.eq.s32.totalorder %s22, 0
      %s25 = sadd.s32 %s24, 1
      %s26 = scalar_select %p23, %s24, %s25
      %p29 = pneg %p23
      %p30 = scmp.eq.s32.totalorder %s14, 1
      %p31 = por %p29, %p30
      %p32 = scmp.ne.s32.totalorder %s24, %s27
      %p33 = scmp.eq.s32.totalorder %s14, 0
      %p34 = por %p32, %p33
      %p35 = scmp.ne.s32.totalorder %s24, %s27
      %p36 = scmp.eq.s32.totalorder %s19, 1
      %p37 = por %p35, %p36
      %p38 = scmp.ne.s32.totalorder %s27, %s28
      %p39 = scmp.eq.s32.totalorder %s19, 0
      %p40 = por %p38, %p39
      %p41 = scmp.ne.s32.totalorder %s27, %s28
      %p42 = scmp.eq.s32.totalorder %s20, 1
      %p43 = por %p41, %p42
      %p45 = scmp.ne.s32.totalorder %s28, %s44
      %p46 = scmp.eq.s32.totalorder %s20, 0
      %p47 = por %p45, %p46
      %s49 = sadd.s32 %s48, 1
      %p52 = scmp.eq.s32.totalorder %s14, 1
      %p53 = scmp.ne.s32.totalorder %s48, %s50
      %p54 = scmp.eq.s32.totalorder %s14, 0
      %p55 = por %p53, %p54
      %p56 = scmp.ne.s32.totalorder %s48, %s50
      %p57 = scmp.eq.s32.totalorder %s19, 1
      %p58 = por %p56, %p57
      %p59 = scmp.ne.s32.totalorder %s50, %s51
      %p60 = scmp.eq.s32.totalorder %s19, 0
      %p61 = por %p59, %p60
      %p62 = scmp.ne.s32.totalorder %s50, %s51
      %p63 = scmp.eq.s32.totalorder %s20, 1
      %p64 = por %p62, %p63
      %p66 = scmp.ne.s32.totalorder %s51, %s65
      %p67 = scmp.eq.s32.totalorder %s20, 0
      %p68 = por %p66, %p67
      %s70 = sadd.s32 %s69, 1
      %p73 = scmp.eq.s32.totalorder %s14, 1
      %p74 = scmp.ne.s32.totalorder %s69, %s71
      %p75 = scmp.eq.s32.totalorder %s14, 0
      %p76 = por %p74, %p75
      %p77 = scmp.ne.s32.totalorder %s69, %s71
      %p78 = scmp.eq.s32.totalorder %s19, 1
      %p79 = por %p77, %p78
      %p80 = scmp.ne.s32.totalorder %s71, %s72
      %p81 = scmp.eq.s32.totalorder %s19, 0
      %p82 = por %p80, %p81
      %p83 = scmp.ne.s32.totalorder %s71, %s72
      %p84 = scmp.eq.s32.totalorder %s20, 1
      %p85 = por %p83, %p84
      %p87 = scmp.ne.s32.totalorder %s72, %s86
      %p88 = scmp.eq.s32.totalorder %s20, 0
      %p89 = por %p87, %p88
      %s91 = sadd.s32 %s90, 1
      %p94 = scmp.eq.s32.totalorder %s14, 1
      %p95 = scmp.ne.s32.totalorder %s90, %s92
      %p96 = scmp.eq.s32.totalorder %s14, 0
      %p97 = por %p95, %p96
      %p98 = scmp.ne.s32.totalorder %s90, %s92
      %p99 = scmp.eq.s32.totalorder %s19, 1
      %p100 = por %p98, %p99
      %p101 = scmp.ne.s32.totalorder %s92, %s93
      %p102 = scmp.eq.s32.totalorder %s19, 0
      %p103 = por %p101, %p102
      %p104 = scmp.ne.s32.totalorder %s92, %s93
      %p105 = scmp.eq.s32.totalorder %s20, 1
      %p106 = por %p104, %p105
      %p108 = scmp.ne.s32.totalorder %s93, %s107
      %p109 = scmp.eq.s32.totalorder %s20, 0
      %p110 = por %p108, %p109
      %s112 = sadd.s32 %s111, 1
      %p115 = scmp.eq.s32.totalorder %s14, 1
      %p116 = scmp.ne.s32.totalorder %s111, %s113
      %p117 = scmp.eq.s32.totalorder %s14, 0
      %p118 = por %p116, %p117
      %p119 = scmp.ne.s32.totalorder %s111, %s113
      %p120 = scmp.eq.s32.totalorder %s19, 1
      %p121 = por %p119, %p120
      %p122 = scmp.ne.s32.totalorder %s113, %s114
      %p123 = scmp.eq.s32.totalorder %s19, 0
      %p124 = por %p122, %p123
      %p125 = scmp.ne.s32.totalorder %s113, %s114
      %p126 = scmp.eq.s32.totalorder %s20, 1
      %p127 = por %p125, %p126
      %p129 = scmp.ne.s32.totalorder %s114, %s128
      %p130 = scmp.eq.s32.totalorder %s20, 0
      %p131 = por %p129, %p130
      %s132 = ssub.s32 %s14, %s21
      %p133 = scmp.eq.s32.totalorder %s132, 0
      %s135 = sadd.s32 %s134, 1
      %s136 = scalar_select %p133, %s134, %s135
      %p139 = pneg %p133
      %p140 = scmp.eq.s32.totalorder %s14, 1
      %p141 = por %p139, %p140
      %p142 = scmp.ne.s32.totalorder %s134, %s137
      %p143 = scmp.eq.s32.totalorder %s14, 0
      %p144 = por %p142, %p143
      %p145 = scmp.ne.s32.totalorder %s134, %s137
      %p146 = scmp.eq.s32.totalorder %s19, 1
      %p147 = por %p145, %p146
      %p148 = scmp.ne.s32.totalorder %s137, %s138
      %p149 = scmp.eq.s32.totalorder %s19, 0
      %p150 = por %p148, %p149
      %p151 = scmp.ne.s32.totalorder %s137, %s138
      %p152 = scmp.eq.s32.totalorder %s20, 1
      %p153 = por %p151, %p152
      %p155 = scmp.ne.s32.totalorder %s138, %s154
      %p156 = scmp.eq.s32.totalorder %s20, 0
      %p157 = por %p155, %p156
      %p158 = scmp.le.s32.totalorder 1, %s14
      %p159 = scmp.lt.s32.totalorder %s14, 3
      %p160 = pnand %p158, %p159
      %p161 = pneg %p160
      // Predicated region
      $region9: #{tpu_custom_call.1} parent=5 // pred_check
        _
      $region10: #{tpu_custom_call.1} parent=5 // pred_check_branch
        %163 = sbr.rel (%p160) target = $region12
      $region11: #{tpu_custom_call.1} parent=5 // pred_region
        %s164 = ssub.s32 %s14, 1
        // Predicated region
        $region13: #{tpu_custom_call.1} parent=11 // pred_check
          %p165 = pneg %p61
        $region14: #{tpu_custom_call.1} parent=11 // pred_check_branch
          %167 = sbr.rel (%p165) target = $region16
        $region15: #{tpu_custom_call.1} parent=11 // pred_region
          _
        $region16: #{tpu_custom_call.1} parent=11 // pred_fallthru
          _
        // Predicated region
        $region17: #{tpu_custom_call.1} parent=11 // pred_check
          %p168 = pneg %p82
        $region18: #{tpu_custom_call.1} parent=11 // pred_check_branch
          %170 = sbr.rel (%p168) target = $region20
        $region19: #{tpu_custom_call.1} parent=11 // pred_region
          _
        $region20: #{tpu_custom_call.1} parent=11 // pred_fallthru
          _
        // Predicated region
        $region21: #{tpu_custom_call.1} parent=11 // pred_check
          %p171 = pneg %p103
        $region22: #{tpu_custom_call.1} parent=11 // pred_check_branch
          %173 = sbr.rel (%p171) target = $region24
        $region23: #{tpu_custom_call.1} parent=11 // pred_region
          _
        $region24: #{tpu_custom_call.1} parent=11 // pred_fallthru
          _
        // Predicated region
        $region25: #{tpu_custom_call.1} parent=11 // pred_check
          %p174 = pneg %p124
        $region26: #{tpu_custom_call.1} parent=11 // pred_check_branch
          %176 = sbr.rel (%p174) target = $region28
        $region27: #{tpu_custom_call.1} parent=11 // pred_region
          _
        $region28: #{tpu_custom_call.1} parent=11 // pred_fallthru
          _
      $region12: #{tpu_custom_call.1} parent=5 // pred_fallthru
        _
      %p177 = scmp.lt.s32.totalorder %s14, 2
      // Predicated region
      $region29: #{tpu_custom_call.1} parent=5 // pred_check
        %p178 = pneg %p177
      $region30: #{tpu_custom_call.1} parent=5 // pred_check_branch
        %180 = sbr.rel (%p178) target = $region32
      $region31: #{tpu_custom_call.1} parent=5 // pred_region
        // Predicated region
        $region33: #{tpu_custom_call.1} parent=31 // pred_check
          %p181 = pneg %p34
        $region34: #{tpu_custom_call.1} parent=31 // pred_check_branch
          %183 = sbr.rel (%p181) target = $region36
        $region35: #{tpu_custom_call.1} parent=31 // pred_region
          %p184 = scmp.lt.s32.totalorder %s14, 1
          %s185 = scalar_select %p184, %s14, 1
          %s186 = smul.addr %s185, 2
          %s187 = scalar_lea.vmem %s0, %s186
        $region36: #{tpu_custom_call.1} parent=31 // pred_fallthru
          _
      $region32: #{tpu_custom_call.1} parent=5 // pred_fallthru
        _
      %p188 = scmp.le.s32.totalorder 1, %s14
      %p189 = scmp.lt.s32.totalorder %s14, 3
      %p190 = pnand %p188, %p189
      %p191 = pneg %p190
      // Predicated region
      $region37: #{tpu_custom_call.1} parent=5 // pred_check
        _
      $region38: #{tpu_custom_call.1} parent=5 // pred_check_branch
        %193 = sbr.rel (%p190) target = $region40
      $region39: #{tpu_custom_call.1} parent=5 // pred_region
        %s194 = ssub.s32 %s14, 1
        %p195 = scmp.lt.s32.totalorder %s19, 1
        %s196 = scalar_select %p195, %s19, 1
        %s197 = smul.addr %s196, 2
        %s198 = scalar_lea.vmem %s0, %s197
        %p199 = pneg %p40
        %p200 = pneg %p37
        %p201 = pneg %p61
        %p202 = pneg %p58
        %p203 = pneg %p82
        %p204 = pneg %p79
        %p205 = pneg %p103
        %p206 = pneg %p100
        %p207 = pneg %p124
        %p208 = pneg %p121
        %p209 = pneg %p150
        %p210 = pneg %p147
        %s211 = sand.u32 %s137, 1
        %s212 = scalar_lea.sflag [#allocation3], %s211
        %s213 = sand.u32 %s137, 1
        %s214 = smul.addr %s213, 8
        %s215 = scalar_lea.vmem [#allocation2], %s214
        %p216 = scmp.lt.s32.totalorder %s19, 1
        %s217 = scalar_select %p216, %s19, 1
        %s218 = smul.addr %s217, 2
        %s219 = scalar_lea.vmem %s0, %s218
        %v220 = vld [vmem:[%s219] sm:$0x1]
        %v221 = vld [vmem:[%s219 + $0x1] sm:$0x1]
        %v222 = vld [vmem:[%s1] sm:$0xff]
        %v223 = vld [vmem:[%s1 + $0x8] sm:$0xff]
        %v224 = vld [vmem:[%s1 + $0x10] sm:$0xff]
        %v225 = vld [vmem:[%s1 + $0x18] sm:$0xff]
        %v226 = vld [vmem:[%s1 + $0x20] sm:$0xff]
        %v227 = vld [vmem:[%s1 + $0x28] sm:$0xff]
        %v228 = vld [vmem:[%s1 + $0x30] sm:$0xff]
        %v229 = vld [vmem:[%s1 + $0x38] sm:$0xff]
        %v230 = vld [vmem:[%s1 + $0x40] sm:$0xff]
        %v231 = vld [vmem:[%s1 + $0x48] sm:$0xff]
        %v232 = vld [vmem:[%s1 + $0x50] sm:$0xff]
        %v233 = vld [vmem:[%s1 + $0x58] sm:$0xff]
        %v234 = vld [vmem:[%s1 + $0x60] sm:$0xff]
        %v235 = vld [vmem:[%s1 + $0x68] sm:$0xff]
        %v236 = vld [vmem:[%s1 + $0x70] sm:$0xff]
        %v237 = vld [vmem:[%s1 + $0x78] sm:$0xff]
        %239 = vset.pattern.permute.xlu0 0
        %240 = vperm.xlu0 %239, %v222
        %v241 = vpop.permute.xlu0 %240
        %244 = vset.pattern.permute.xlu0 0
        %245 = vperm.xlu0 %244, %v223
        %v246 = vpop.permute.xlu0 %245
        %249 = vset.pattern.permute.xlu0 0
        %250 = vperm.xlu0 %249, %v224
        %v251 = vpop.permute.xlu0 %250
        %254 = vset.pattern.permute.xlu0 0
        %255 = vperm.xlu0 %254, %v225
        %v256 = vpop.permute.xlu0 %255
        %259 = vset.pattern.permute.xlu0 0
        %260 = vperm.xlu0 %259, %v226
        %v261 = vpop.permute.xlu0 %260
        %264 = vset.pattern.permute.xlu0 0
        %265 = vperm.xlu0 %264, %v227
        %v266 = vpop.permute.xlu0 %265
        %269 = vset.pattern.permute.xlu0 0
        %270 = vperm.xlu0 %269, %v228
        %v271 = vpop.permute.xlu0 %270
        %274 = vset.pattern.permute.xlu0 0
        %275 = vperm.xlu0 %274, %v229
        %v276 = vpop.permute.xlu0 %275
        %279 = vset.pattern.permute.xlu0 0
        %280 = vperm.xlu0 %279, %v230
        %v281 = vpop.permute.xlu0 %280
        %284 = vset.pattern.permute.xlu0 0
        %285 = vperm.xlu0 %284, %v231
        %v286 = vpop.permute.xlu0 %285
        %289 = vset.pattern.permute.xlu0 0
        %290 = vperm.xlu0 %289, %v232
        %v291 = vpop.permute.xlu0 %290
        %294 = vset.pattern.permute.xlu0 0
        %295 = vperm.xlu0 %294, %v233
        %v296 = vpop.permute.xlu0 %295
        %299 = vset.pattern.permute.xlu0 0
        %300 = vperm.xlu0 %299, %v234
        %v301 = vpop.permute.xlu0 %300
        %304 = vset.pattern.permute.xlu0 0
        %305 = vperm.xlu0 %304, %v235
        %v306 = vpop.permute.xlu0 %305
        %309 = vset.pattern.permute.xlu0 0
        %310 = vperm.xlu0 %309, %v236
        %v311 = vpop.permute.xlu0 %310
        %314 = vset.pattern.permute.xlu0 0
        %315 = vperm.xlu0 %314, %v237
        %v316 = vpop.permute.xlu0 %315
        %v318 = vlaneseq
        %v319 = vshrl.u32 %v318, 7
        %v320 = vsub.s32 0, %v319
        %v321 = vrot.slane %v220, %v320
        %v322 = vmul.f32 %v241, %v321
        %v323 = vmul.f32 %v246, %v321
        %v324 = vmul.f32 %v251, %v321
        %v325 = vmul.f32 %v256, %v321
        %v326 = vmul.f32 %v261, %v321
        %v327 = vmul.f32 %v266, %v321
        %v328 = vmul.f32 %v271, %v321
        %v329 = vmul.f32 %v276, %v321
        %v330 = vmul.f32 %v281, %v321
        %v331 = vmul.f32 %v286, %v321
        %v332 = vmul.f32 %v291, %v321
        %v333 = vmul.f32 %v296, %v321
        %v334 = vmul.f32 %v301, %v321
        %v335 = vmul.f32 %v306, %v321
        %v336 = vmul.f32 %v311, %v321
        %v337 = vmul.f32 %v316, %v321
        %338 = vset.pattern.permute.xlu0 1
        %339 = vperm.xlu0 %338, %v222
        %v340 = vpop.permute.xlu0 %339
        %342 = vset.pattern.permute.xlu0 1
        %343 = vperm.xlu0 %342, %v223
        %v344 = vpop.permute.xlu0 %343
        %346 = vset.pattern.permute.xlu0 1
        %347 = vperm.xlu0 %346, %v224
        %v348 = vpop.permute.xlu0 %347
        %350 = vset.pattern.permute.xlu0 1
        %351 = vperm.xlu0 %350, %v225
        %v352 = vpop.permute.xlu0 %351
        %354 = vset.pattern.permute.xlu0 1
        %355 = vperm.xlu0 %354, %v226
        %v356 = vpop.permute.xlu0 %355
        %358 = vset.pattern.permute.xlu0 1
        %359 = vperm.xlu0 %358, %v227
        %v360 = vpop.permute.xlu0 %359
        %362 = vset.pattern.permute.xlu0 1
        %363 = vperm.xlu0 %362, %v228
        %v364 = vpop.permute.xlu0 %363
        %366 = vset.pattern.permute.xlu0 1
        %367 = vperm.xlu0 %366, %v229
        %v368 = vpop.permute.xlu0 %367
        %370 = vset.pattern.permute.xlu0 1
        %371 = vperm.xlu0 %370, %v230
        %v372 = vpop.permute.xlu0 %371
        %374 = vset.pattern.permute.xlu0 1
        %375 = vperm.xlu0 %374, %v231
        %v376 = vpop.permute.xlu0 %375
        %378 = vset.pattern.permute.xlu0 1
        %379 = vperm.xlu0 %378, %v232
        %v380 = vpop.permute.xlu0 %379
        %382 = vset.pattern.permute.xlu0 1
        %383 = vperm.xlu0 %382, %v233
        %v384 = vpop.permute.xlu0 %383
        %386 = vset.pattern.permute.xlu0 1
        %387 = vperm.xlu0 %386, %v234
        %v388 = vpop.permute.xlu0 %387
        %390 = vset.pattern.permute.xlu0 1
        %391 = vperm.xlu0 %390, %v235
        %v392 = vpop.permute.xlu0 %391
        %394 = vset.pattern.permute.xlu0 1
        %395 = vperm.xlu0 %394, %v236
        %v396 = vpop.permute.xlu0 %395
        %398 = vset.pattern.permute.xlu0 1
        %399 = vperm.xlu0 %398, %v237
        %v400 = vpop.permute.xlu0 %399
        %v402 = vlaneseq
        %v403 = vshrl.u32 %v402, 7
        %v404 = vsub.s32 0, %v403
        %v405 = vrot.slane %v221, %v404
        %v406 = vmul.f32 %v340, %v405
        %v407 = vmul.f32 %v344, %v405
        %v408 = vmul.f32 %v348, %v405
        %v409 = vmul.f32 %v352, %v405
        %v410 = vmul.f32 %v356, %v405
        %v411 = vmul.f32 %v360, %v405
        %v412 = vmul.f32 %v364, %v405
        %v413 = vmul.f32 %v368, %v405
        %v414 = vmul.f32 %v372, %v405
        %v415 = vmul.f32 %v376, %v405
        %v416 = vmul.f32 %v380, %v405
        %v417 = vmul.f32 %v384, %v405
        %v418 = vmul.f32 %v388, %v405
        %v419 = vmul.f32 %v392, %v405
        %v420 = vmul.f32 %v396, %v405
        %v421 = vmul.f32 %v400, %v405
        %v422 = vadd.f32 %v322, %v406
        %v423 = vadd.f32 %v323, %v407
        %v424 = vadd.f32 %v324, %v408
        %v425 = vadd.f32 %v325, %v409
        %v426 = vadd.f32 %v326, %v410
        %v427 = vadd.f32 %v327, %v411
        %v428 = vadd.f32 %v328, %v412
        %v429 = vadd.f32 %v329, %v413
        %v430 = vadd.f32 %v330, %v414
        %v431 = vadd.f32 %v331, %v415
        %v432 = vadd.f32 %v332, %v416
        %v433 = vadd.f32 %v333, %v417
        %v434 = vadd.f32 %v334, %v418
        %v435 = vadd.f32 %v335, %v419
        %v436 = vadd.f32 %v336, %v420
        %v437 = vadd.f32 %v337, %v421
        %v438 = vld [vmem:[%s2] sm:$0xff]
        %v439 = vld [vmem:[%s2 + $0x8] sm:$0xff]
        %v440 = vld [vmem:[%s2 + $0x10] sm:$0xff]
        %v441 = vld [vmem:[%s2 + $0x18] sm:$0xff]
        %v442 = vld [vmem:[%s2 + $0x20] sm:$0xff]
        %v443 = vld [vmem:[%s2 + $0x28] sm:$0xff]
        %v444 = vld [vmem:[%s2 + $0x30] sm:$0xff]
        %v445 = vld [vmem:[%s2 + $0x38] sm:$0xff]
        %v446 = vld [vmem:[%s2 + $0x40] sm:$0xff]
        %v447 = vld [vmem:[%s2 + $0x48] sm:$0xff]
        %v448 = vld [vmem:[%s2 + $0x50] sm:$0xff]
        %v449 = vld [vmem:[%s2 + $0x58] sm:$0xff]
        %v450 = vld [vmem:[%s2 + $0x60] sm:$0xff]
        %v451 = vld [vmem:[%s2 + $0x68] sm:$0xff]
        %v452 = vld [vmem:[%s2 + $0x70] sm:$0xff]
        %v453 = vld [vmem:[%s2 + $0x78] sm:$0xff]
        %455 = vset.pattern.permute.xlu0 0
        %456 = vperm.xlu0 %455, %v438
        %v457 = vpop.permute.xlu0 %456
        %460 = vset.pattern.permute.xlu0 0
        %461 = vperm.xlu0 %460, %v439
        %v462 = vpop.permute.xlu0 %461
        %465 = vset.pattern.permute.xlu0 0
        %466 = vperm.xlu0 %465, %v440
        %v467 = vpop.permute.xlu0 %466
        %470 = vset.pattern.permute.xlu0 0
        %471 = vperm.xlu0 %470, %v441
        %v472 = vpop.permute.xlu0 %471
        %475 = vset.pattern.permute.xlu0 0
        %476 = vperm.xlu0 %475, %v442
        %v477 = vpop.permute.xlu0 %476
        %480 = vset.pattern.permute.xlu0 0
        %481 = vperm.xlu0 %480, %v443
        %v482 = vpop.permute.xlu0 %481
        %485 = vset.pattern.permute.xlu0 0
        %486 = vperm.xlu0 %485, %v444
        %v487 = vpop.permute.xlu0 %486
        %490 = vset.pattern.permute.xlu0 0
        %491 = vperm.xlu0 %490, %v445
        %v492 = vpop.permute.xlu0 %491
        %495 = vset.pattern.permute.xlu0 0
        %496 = vperm.xlu0 %495, %v446
        %v497 = vpop.permute.xlu0 %496
        %500 = vset.pattern.permute.xlu0 0
        %501 = vperm.xlu0 %500, %v447
        %v502 = vpop.permute.xlu0 %501
        %505 = vset.pattern.permute.xlu0 0
        %506 = vperm.xlu0 %505, %v448
        %v507 = vpop.permute.xlu0 %506
        %510 = vset.pattern.permute.xlu0 0
        %511 = vperm.xlu0 %510, %v449
        %v512 = vpop.permute.xlu0 %511
        %515 = vset.pattern.permute.xlu0 0
        %516 = vperm.xlu0 %515, %v450
        %v517 = vpop.permute.xlu0 %516
        %520 = vset.pattern.permute.xlu0 0
        %521 = vperm.xlu0 %520, %v451
        %v522 = vpop.permute.xlu0 %521
        %525 = vset.pattern.permute.xlu0 0
        %526 = vperm.xlu0 %525, %v452
        %v527 = vpop.permute.xlu0 %526
        %530 = vset.pattern.permute.xlu0 0
        %531 = vperm.xlu0 %530, %v453
        %v532 = vpop.permute.xlu0 %531
        %v534 = vadd.f32 %v422, %v457
        %v535 = vadd.f32 %v423, %v462
        %v536 = vadd.f32 %v424, %v467
        %v537 = vadd.f32 %v425, %v472
        %v538 = vadd.f32 %v426, %v477
        %v539 = vadd.f32 %v427, %v482
        %v540 = vadd.f32 %v428, %v487
        %v541 = vadd.f32 %v429, %v492
        %v542 = vadd.f32 %v430, %v497
        %v543 = vadd.f32 %v431, %v502
        %v544 = vadd.f32 %v432, %v507
        %v545 = vadd.f32 %v433, %v512
        %v546 = vadd.f32 %v434, %v517
        %v547 = vadd.f32 %v435, %v522
        %v548 = vadd.f32 %v436, %v527
        %v549 = vadd.f32 %v437, %v532
        %v550 = vmax.f32 %v534, 0.0
        %v551 = vmax.f32 %v535, 0.0
        %v552 = vmax.f32 %v536, 0.0
        %v553 = vmax.f32 %v537, 0.0
        %v554 = vmax.f32 %v538, 0.0
        %v555 = vmax.f32 %v539, 0.0
        %v556 = vmax.f32 %v540, 0.0
        %v557 = vmax.f32 %v541, 0.0
        %v558 = vmax.f32 %v542, 0.0
        %v559 = vmax.f32 %v543, 0.0
        %v560 = vmax.f32 %v544, 0.0
        %v561 = vmax.f32 %v545, 0.0
        %v562 = vmax.f32 %v546, 0.0
        %v563 = vmax.f32 %v547, 0.0
        %v564 = vmax.f32 %v548, 0.0
        %v565 = vmax.f32 %v549, 0.0
        %v566 = vld [vmem:[%s3] sm:$0xff]
        %v567 = vld [vmem:[%s4] sm:$0xff]
        %569 = vset.pattern.permute.xlu0 0
        %570 = vperm.xlu0 %569, %v567
        %v571 = vpop.permute.xlu0 %570
        %573 = vmatprep.subr.mxu0 0.0
        %574 = vmatpush1.msra.mxu0 %v550
        %575 = vmatprep.subr.mxu0 0.0
        %576 = vmatpush1.msra.mxu0 %v551
        %577 = vmatprep.subr.mxu0 0.0
        %578 = vmatpush1.msra.mxu0 %v552
        %579 = vmatprep.subr.mxu0 0.0
        %580 = vmatpush1.msra.mxu0 %v553
        %581 = vmatprep.subr.mxu0 0.0
        %582 = vmatpush1.msra.mxu0 %v554
        %583 = vmatprep.subr.mxu0 0.0
        %584 = vmatpush1.msra.mxu0 %v555
        %585 = vmatprep.subr.mxu0 0.0
        %586 = vmatpush1.msra.mxu0 %v556
        %587 = vmatprep.subr.mxu0 0.0
        %588 = vmatpush1.msra.mxu0 %v557
        %589 = vmatprep.subr.mxu0 0.0
        %590 = vmatpush1.msra.mxu0 %v558
        %591 = vmatprep.subr.mxu0 0.0
        %592 = vmatpush1.msra.mxu0 %v559
        %593 = vmatprep.subr.mxu0 0.0
        %594 = vmatpush1.msra.mxu0 %v560
        %595 = vmatprep.subr.mxu0 0.0
        %596 = vmatpush1.msra.mxu0 %v561
        %597 = vmatprep.subr.mxu0 0.0
        %598 = vmatpush1.msra.mxu0 %v562
        %599 = vmatprep.subr.mxu0 0.0
        %600 = vmatpush1.msra.mxu0 %v563
        %601 = vmatprep.subr.mxu0 0.0
        %602 = vmatpush1.msra.mxu0 %v564
        %603 = vmatprep.subr.mxu0 0.0
        %604 = vmatpush1.msra.mxu0 %v565
        %605 = vmatprep.subr.mxu0 0.0
        %606 = vmatpush1.msra.mxu0 0.0
        %607 = vmatprep.subr.mxu0 0.0
        %608 = vmatpush1.msra.mxu0 0.0
        %609 = vmatprep.subr.mxu0 0.0
        %610 = vmatpush1.msra.mxu0 0.0
        %611 = vmatprep.subr.mxu0 0.0
        %612 = vmatpush1.msra.mxu0 0.0
        %613 = vmatprep.subr.mxu0 0.0
        %614 = vmatpush1.msra.mxu0 0.0
        %615 = vmatprep.subr.mxu0 0.0
        %616 = vmatpush1.msra.mxu0 0.0
        %617 = vmatprep.subr.mxu0 0.0
        %618 = vmatpush1.msra.mxu0 0.0
        %619 = vmatprep.subr.mxu0 0.0
        %620 = vmatpush1.msra.mxu0 0.0
        %621 = vmatprep.subr.mxu0 0.0
        %622 = vmatpush1.msra.mxu0 0.0
        %623 = vmatprep.subr.mxu0 0.0
        %624 = vmatpush1.msra.mxu0 0.0
        %625 = vmatprep.subr.mxu0 0.0
        %626 = vmatpush1.msra.mxu0 0.0
        %627 = vmatprep.subr.mxu0 0.0
        %628 = vmatpush1.msra.mxu0 0.0
        %629 = vmatprep.subr.mxu0 0.0
        %630 = vmatpush1.msra.mxu0 0.0
        %631 = vmatprep.subr.mxu0 0.0
        %632 = vmatpush1.msra.mxu0 0.0
        %633 = vmatprep.subr.mxu0 0.0
        %634 = vmatpush1.msra.mxu0 0.0
        %635 = vmatprep.subr.mxu0 0.0
        %636 = vmatpush1.msra.mxu0 0.0
        %637 = vmatprep.mubr.f32.mxu0 0.0
        %638 = vmatmul.mubr.f32.gmra.mrb[0].mxu0 %v566
        %v639 = vpop.f32.mrb[0].mxu0
        %v640 = vadd.f32 %v571, %v639
        %v641 = vpop.f32.mrb[0].mxu0
        %642 = vdwg.mxu0
        %v643 = vmax.f32 %v640, 0.0
        %v644 = vand.u32 2147483647, %v640
        %v645 = vsub.f32 0.0, %v644
        %v646 = vmul.f32 %v645, 1.442695
        %v647 = vpow.pop %v646
        %v648 = vadd.f32 %v647, 1.0
        %v649 = vlog2.pop %v648
        %v650 = vmul.f32 %v649, 0.6931472
        %v651 = vmul.f32 -0.5, %v647
        %v652 = vadd.f32 %v651, 1.0
        %v653 = vmul.f32 %v652, %v647
        %v654 = vand.u32 2147483647, %v647
        %vm655 = vcmp.lt.f32.partialorder %v654, 0.0004427343
        %v656 = vsel %vm655, %v653, %v650
        %v657 = vadd.f32 %v643, %v656
        %v658 = vadd.f32 %v657, 1e-06
        %v659 = vlaneseq
        %v660 = vshrl.u32 %v659, 7
        %vm661 = vcmp.ge.s32.totalorder %v660, 4
        %v662 = vsel %vm661, %v658, %v640
        %663 = vst [vmem:[%s215] sm:$0xff] %v662
        %s664 = sand.u32 %s137, 1
        %s665 = scalar_lea.sflag [#allocation3], %s664
        %s666 = sand.u32 %s137, 1
        %s667 = smul.addr %s666, 8
        %s668 = scalar_lea.vmem [#allocation2], %s667
        // Predicated region
        $region41: #{tpu_custom_call.1} parent=39 // pred_check
          %p669 = pneg %p147
        $region42: #{tpu_custom_call.1} parent=39 // pred_check_branch
          %671 = sbr.rel (%p669) target = $region44
        $region43: #{tpu_custom_call.1} parent=39 // pred_region
          %s673 = ssub.s32 128, 128
          %674 = vsyncadd %s665, %s673
          %s675 = smul.addr %s19, 128
          %s676 = scalar_lea.hbm %s5, %s675
          %s678 = sshll.u32 %s668, 4
          %s679 = int_to_ptr.vmem [resolvable:$true] %s678
          %681 = dma.vmem_to_hbm [thread:$0]  %s679, 128, %s676, %s665
        $region44: #{tpu_custom_call.1} parent=39 // pred_fallthru
          _
      $region40: #{tpu_custom_call.1} parent=5 // pred_fallthru
        _
      %p682 = scmp.le.s32.totalorder 2, %s14
      // Predicated region
      $region45: #{tpu_custom_call.1} parent=5 // pred_check
        %p683 = pneg %p682
      $region46: #{tpu_custom_call.1} parent=5 // pred_check_branch
        %685 = sbr.rel (%p683) target = $region48
      $region47: #{tpu_custom_call.1} parent=5 // pred_region
        %s686 = ssub.s32 %s14, 2
        // Predicated region
        $region49: #{tpu_custom_call.1} parent=47 // pred_check
          %p687 = pneg %p153
        $region50: #{tpu_custom_call.1} parent=47 // pred_check_branch
          %689 = sbr.rel (%p687) target = $region52
        $region51: #{tpu_custom_call.1} parent=47 // pred_region
          %s690 = sand.u32 %s138, 1
          %s691 = scalar_lea.sflag [#allocation3], %s690
          %s692 = sand.u32 %s138, 1
          %s693 = smul.addr %s692, 8
          %s694 = scalar_lea.vmem [#allocation2], %s693
          %695 = dma.done %s691, 128
        $region52: #{tpu_custom_call.1} parent=47 // pred_fallthru
          _
      $region48: #{tpu_custom_call.1} parent=5 // pred_fallthru
        _
    $region6: #{tpu_custom_call.1} parent=1 // loop_footer
      %s18 = sadd.s32 1, %s14
    $region7: #{tpu_custom_call.1} parent=1 // loop_footer_branch
      %13 = sbr.rel target = $region3
    $region8: #{tpu_custom_call.1} parent=1 // loop_exit
      _
    %696 = vsyncpa [#allocation3], 1
    %s697 = scalar_lea.sflag [#allocation3], 1
    %698 = vsyncpa %s697, 1

</llo_original>
